<compile_context>
chip_gen: v7x
topology: tpu7x:2x2x1
jax: 0.10.0
libtpu: 0.0.40
codegen_flags: <defaults>
</compile_context>

<pallas_src>
import functools

import jax
import jax.numpy as jnp
from jax.experimental import pallas as pl
from jax.experimental.pallas import tpu as pltpu


def critic_kernel(x_ref, w1_ref, b1_ref, w2_ref, b2_ref, w3_ref, b3_ref, o_ref):
    # fc1 + relu: downcast x in-kernel (VPU) so HBM only carries the original f32,
    # bf16 MXU matmul with f32 accumulation, f32 epilogue.
    x = x_ref[...].astype(jnp.bfloat16)
    h1 = jnp.dot(x, w1_ref[...], preferred_element_type=jnp.float32)
    h1 = jnp.maximum(h1 + b1_ref[...], 0.0)

    # fc2 + relu
    h2 = jnp.dot(h1.astype(jnp.bfloat16), w2_ref[...],
                 preferred_element_type=jnp.float32)
    h2 = jnp.maximum(h2 + b2_ref[...], 0.0)

    # fc3 (128 -> 1): contract over H on the MXU; (1, H) x (TB, H) -> (1, TB)
    # lane-dense output row (keeps the XLU free, store stays unmasked).
    v = jax.lax.dot_general(w3_ref[...], h2.astype(jnp.bfloat16),
                            dimension_numbers=(((1,), (1,)), ((), ())),
                            preferred_element_type=jnp.float32)
    o_ref[...] = (v + b3_ref[0, 0]).astype(o_ref.dtype)


def _round_up(x, m):
    return ((x + m - 1) // m) * m


@functools.partial(jax.jit, static_argnames=("tb_max",))
def critic_forward(x, params, *, tb_max=2048):
    """x: (B, D) float. params: dict of w1,b1,w2,b2,w3,b3 (weights as (in, out)).
    Returns (B, 1) float32."""
    B, D = x.shape
    H = params["w1"].shape[1]  # 128

    # Feature dim: pad only when not lane-aligned.  x keeps its dtype (f32);
    # the bf16 downcast happens inside the kernel, not as an extra XLA pass.
    D_pad = D if D % 128 == 0 else _round_up(D, 128)

    x_bytes = jnp.dtype(x.dtype).itemsize

    # Per-tile VMEM footprint.  Pallas double-buffers every BlockSpec input,
    # including the weights held resident via constant index_maps.
    def tile_bytes(tb):
        return (2 * tb * D_pad * x_bytes           # x tiles (double-buffered)
                + 2 * (D_pad * H + H * H) * 2      # w1, w2 (bf16, double-buffered)
                + 2 * (2 * H * 4 + H * 2)          # b1, b2 (f32), w3 row (bf16)
                + 2 * tb * H * 4                   # h1, h2 f32 intermediates
                + 2 * tb * 4)                      # output rows (double-buffered)

    VMEM_BUDGET = 40 << 20  # headroom inside v7x's 64 MiB physical VMEM

    if B <= 128:
        TB = 128  # single tile, 128-lane output row -> unmasked stores
    else:
        # >= 2 tiles so the "parallel" batch axis can use both v7x TensorCores,
        # as large as the VMEM budget allows to amortize per-grid-step overhead.
        TB = min(tb_max, _round_up(pl.cdiv(B, 2), 128))
        while TB > 128 and tile_bytes(TB) > VMEM_BUDGET:
            TB = max(128, _round_up(TB // 2, 128))
    # TODO(synk): if tile_bytes(128) still exceeds the budget (extremely large D),
    # add a trailing "arbitrary" K grid axis over D with an f32 h1 accumulator.

    num_tiles = pl.cdiv(B, TB)
    B_pad = num_tiles * TB  # all blocks full -> no partial DMAs, unmasked stores

    # Single conditional pad (zeros, original dtype); no copy at all when aligned.
    pad_b, pad_d = B_pad - B, D_pad - D
    x_in = jnp.pad(x, ((0, pad_b), (0, pad_d))) if (pad_b or pad_d) else x

    w1 = params["w1"].astype(jnp.bfloat16)
    if pad_d:
        w1 = jnp.pad(w1, ((0, pad_d), (0, 0)))
    w2 = params["w2"].astype(jnp.bfloat16)
    w3 = params["w3"].astype(jnp.bfloat16).reshape(1, H)
    b1 = params["b1"].astype(jnp.float32).reshape(1, H)
    b2 = params["b2"].astype(jnp.float32).reshape(1, H)
    b3 = params["b3"].astype(jnp.float32).reshape(1, 1)

    vmem_limit = int(min(48 << 20, max(32 << 20, tile_bytes(TB) + (4 << 20))))

    out_row = pl.pallas_call(
        critic_kernel,
        out_shape=jax.ShapeDtypeStruct((1, B_pad), jnp.float32),
        grid=(num_tiles,),
        in_specs=[
            pl.BlockSpec((TB, D_pad), lambda i: (i, 0)),       # x: streamed per tile
            pl.BlockSpec((D_pad, H), lambda i: (0, 0)),        # w1: resident
            pl.BlockSpec((1, H), lambda i: (0, 0)),            # b1
            pl.BlockSpec((H, H), lambda i: (0, 0)),            # w2
            pl.BlockSpec((1, H), lambda i: (0, 0)),            # b2
            pl.BlockSpec((1, H), lambda i: (0, 0)),            # w3 (row)
            pl.BlockSpec(memory_space=pltpu.MemorySpace.SMEM), # b3 scalar
        ],
        out_specs=pl.BlockSpec((1, TB), lambda i: (0, i)),     # lane-dense output row
        compiler_params=pltpu.CompilerParams(
            dimension_semantics=("parallel",),
            vmem_limit_bytes=vmem_limit,
        ),
    )(x_in, w1, b1, w2, b2, w3, b3)

    return out_row[0, :B].reshape(B, 1)


def init_params(key, input_dim, hidden=128, out=1):
    """Deterministic init mimicking nn.Linear's U(-1/sqrt(fan_in), 1/sqrt(fan_in)).
    Weights stored as (in_features, out_features) so the kernel does x @ W + b."""
    ks = jax.random.split(key, 6)

    def lin(kw, kb, fan_in, fan_out):
        bound = 1.0 / jnp.sqrt(fan_in)
        w = jax.random.uniform(kw, (fan_in, fan_out), jnp.float32, -bound, bound)
        b = jax.random.uniform(kb, (1, fan_out), jnp.float32, -bound, bound)
        return w, b

    w1, b1 = lin(ks[0], ks[1], input_dim, hidden)
    w2, b2 = lin(ks[2], ks[3], hidden, hidden)
    w3, b3 = lin(ks[4], ks[5], hidden, out)
    return {"w1": w1, "b1": b1, "w2": w2, "b2": b2, "w3": w3, "b3": b3}


def critic_reference(x, p):
    """Reference emulating the kernel's bf16 roundings with f32 accumulation.
    Note: bf16 weights/activations deviate from the pure-f32 PyTorch module by
    roughly bf16 epsilon (~1e-2 relative for large D); validate that tolerance
    against the real model if exact f32 semantics are required."""
    f32 = jnp.float32
    bf = lambda a: a.astype(jnp.bfloat16).astype(f32)
    h1 = jnp.maximum(bf(x) @ bf(p["w1"]) + p["b1"], 0.0)
    h2 = jnp.maximum(bf(h1) @ bf(p["w2"]) + p["b2"], 0.0)
    return bf(h2) @ bf(p["w3"]) + p["b3"]


if __name__ == "__main__":
    key = jax.random.PRNGKey(0)
    k_param, k_x = jax.random.split(key)

    batch = 8
    input_dim = 32

    params = init_params(k_param, input_dim)
    x = jax.random.normal(k_x, (batch, input_dim), jnp.float32)

    out = jax.block_until_ready(critic_forward(x, params))

    ref = critic_reference(x, params)
    assert out.shape == (batch, 1), out.shape
    assert jnp.allclose(out, ref, atol=2e-3, rtol=2e-3), "mismatch vs reference"

    print("KERNEL_OK")
</pallas_src>

<mosaic_0001>
module attributes {stable_mosaic.version = 11 : i64} {
  func.func @critic_kernel(%arg0: i32, %arg1: memref<128x128xf32, #tpu.memory_space<vmem>>, %arg2: memref<128x128xbf16, #tpu.memory_space<vmem>>, %arg3: memref<1x128xf32, #tpu.memory_space<vmem>>, %arg4: memref<128x128xbf16, #tpu.memory_space<vmem>>, %arg5: memref<1x128xf32, #tpu.memory_space<vmem>>, %arg6: memref<1x128xbf16, #tpu.memory_space<vmem>>, %arg7: memref<1x1xf32, #tpu.memory_space<smem>>, %arg8: memref<1x128xf32, #tpu.memory_space<vmem>>) attributes {dimension_semantics = [#tpu.dimension_semantics<parallel>], iteration_bounds = array<i64: 1>, scalar_prefetch = 0 : i64, scratch_operands = 0 : i64, tpu.core_type = #tpu.core_type<tc>, window_params = [{transform_indices = @transform_0, window_bounds = array<i64: 128, 128>}, {pipeline_mode = #tpu.pipeline_mode<synchronous>, transform_indices = @transform_1, window_bounds = array<i64: 128, 128>}, {pipeline_mode = #tpu.pipeline_mode<synchronous>, transform_indices = @transform_2, window_bounds = array<i64: 1, 128>}, {pipeline_mode = #tpu.pipeline_mode<synchronous>, transform_indices = @transform_3, window_bounds = array<i64: 128, 128>}, {pipeline_mode = #tpu.pipeline_mode<synchronous>, transform_indices = @transform_4, window_bounds = array<i64: 1, 128>}, {pipeline_mode = #tpu.pipeline_mode<synchronous>, transform_indices = @transform_5, window_bounds = array<i64: 1, 128>}, {transform_indices = @transform_6, window_bounds = array<i64: 1, 1>}, {transform_indices = @transform_7, window_bounds = array<i64: 1, 128>}]} {
    %c0 = arith.constant 0 : index
    %c0_0 = arith.constant 0 : index
    %0 = vector.load %arg1[%c0, %c0_0] : memref<128x128xf32, #tpu.memory_space<vmem>>, vector<128x128xf32>
    %1 = arith.truncf %0 : vector<128x128xf32> to vector<128x128xbf16>
    %c0_1 = arith.constant 0 : index
    %c0_2 = arith.constant 0 : index
    %2 = vector.load %arg2[%c0_1, %c0_2] : memref<128x128xbf16, #tpu.memory_space<vmem>>, vector<128x128xbf16>
    %cst = arith.constant dense<0.000000e+00> : vector<128x128xf32>
    %3 = tpu.matmul %1, %2, %cst {dimension_numbers = #tpu.dot_dimension_numbers<[1], [0], [0], [1], [0, 0, 1, 1], [], []>} : vector<128x128xbf16>, vector<128x128xbf16>, vector<128x128xf32> -> vector<128x128xf32>
    %c0_3 = arith.constant 0 : index
    %c0_4 = arith.constant 0 : index
    %4 = vector.load %arg3[%c0_3, %c0_4] : memref<1x128xf32, #tpu.memory_space<vmem>>, vector<1x128xf32>
    %5 = vector.broadcast %4 : vector<1x128xf32> to vector<128x128xf32>
    %6 = arith.addf %3, %5 : vector<128x128xf32>
    %cst_5 = arith.constant 0.000000e+00 : f32
    %7 = vector.broadcast %cst_5 : f32 to vector<128x128xf32>
    %8 = arith.maximumf %6, %7 : vector<128x128xf32>
    %9 = arith.truncf %8 : vector<128x128xf32> to vector<128x128xbf16>
    %c0_6 = arith.constant 0 : index
    %c0_7 = arith.constant 0 : index
    %10 = vector.load %arg4[%c0_6, %c0_7] : memref<128x128xbf16, #tpu.memory_space<vmem>>, vector<128x128xbf16>
    %cst_8 = arith.constant dense<0.000000e+00> : vector<128x128xf32>
    %11 = tpu.matmul %9, %10, %cst_8 {dimension_numbers = #tpu.dot_dimension_numbers<[1], [0], [0], [1], [0, 0, 1, 1], [], []>} : vector<128x128xbf16>, vector<128x128xbf16>, vector<128x128xf32> -> vector<128x128xf32>
    %c0_9 = arith.constant 0 : index
    %c0_10 = arith.constant 0 : index
    %12 = vector.load %arg5[%c0_9, %c0_10] : memref<1x128xf32, #tpu.memory_space<vmem>>, vector<1x128xf32>
    %13 = vector.broadcast %12 : vector<1x128xf32> to vector<128x128xf32>
    %14 = arith.addf %11, %13 : vector<128x128xf32>
    %cst_11 = arith.constant 0.000000e+00 : f32
    %15 = vector.broadcast %cst_11 : f32 to vector<128x128xf32>
    %16 = arith.maximumf %14, %15 : vector<128x128xf32>
    %c0_12 = arith.constant 0 : index
    %c0_13 = arith.constant 0 : index
    %17 = vector.load %arg6[%c0_12, %c0_13] : memref<1x128xbf16, #tpu.memory_space<vmem>>, vector<1x128xbf16>
    %18 = arith.truncf %16 : vector<128x128xf32> to vector<128x128xbf16>
    %cst_14 = arith.constant dense<0.000000e+00> : vector<1x128xf32>
    %19 = tpu.matmul %17, %18, %cst_14 {dimension_numbers = #tpu.dot_dimension_numbers<[1], [1], [0], [0], [0, 0, 1, 0], [], []>} : vector<1x128xbf16>, vector<128x128xbf16>, vector<1x128xf32> -> vector<1x128xf32>
    %c0_15 = arith.constant 0 : index
    %c0_16 = arith.constant 0 : index
    %20 = memref.load %arg7[%c0_15, %c0_16] : memref<1x1xf32, #tpu.memory_space<smem>>
    %21 = vector.broadcast %20 : f32 to vector<1x128xf32>
    %22 = arith.addf %19, %21 : vector<1x128xf32>
    %c0_17 = arith.constant 0 : index
    %c0_18 = arith.constant 0 : index
    %23 = vector.load %arg8[%c0_17, %c0_18] : memref<1x128xf32, #tpu.memory_space<vmem>>, vector<1x128xf32>
    tpu.vector_store %arg8[%c0_17, %c0_18], %22 {strides = array<i32>} : memref<1x128xf32, #tpu.memory_space<vmem>>, vector<1x128xf32>,
    return
  }
  func.func @transform_0(%arg0: i32) -> (i32, i32) {
    %c0_i32 = arith.constant 0 : i32
    %c0_i32_0 = arith.constant 0 : i32
    return %arg0, %c0_i32 : i32, i32
  }
  func.func @transform_1(%arg0: i32) -> (i32, i32) {
    %c0_i32 = arith.constant 0 : i32
    %c0_i32_0 = arith.constant 0 : i32
    %c0_i32_1 = arith.constant 0 : i32
    return %c0_i32, %c0_i32_0 : i32, i32
  }
  func.func @transform_2(%arg0: i32) -> (i32, i32) {
    %c0_i32 = arith.constant 0 : i32
    %c0_i32_0 = arith.constant 0 : i32
    %c0_i32_1 = arith.constant 0 : i32
    return %c0_i32, %c0_i32_0 : i32, i32
  }
  func.func @transform_3(%arg0: i32) -> (i32, i32) {
    %c0_i32 = arith.constant 0 : i32
    %c0_i32_0 = arith.constant 0 : i32
    %c0_i32_1 = arith.constant 0 : i32
    return %c0_i32, %c0_i32_0 : i32, i32
  }
  func.func @transform_4(%arg0: i32) -> (i32, i32) {
    %c0_i32 = arith.constant 0 : i32
    %c0_i32_0 = arith.constant 0 : i32
    %c0_i32_1 = arith.constant 0 : i32
    return %c0_i32, %c0_i32_0 : i32, i32
  }
  func.func @transform_5(%arg0: i32) -> (i32, i32) {
    %c0_i32 = arith.constant 0 : i32
    %c0_i32_0 = arith.constant 0 : i32
    %c0_i32_1 = arith.constant 0 : i32
    return %c0_i32, %c0_i32_0 : i32, i32
  }
  func.func @transform_6(%arg0: i32) -> (i32, i32) {
    %c0_i32 = arith.constant 0 : i32
    %c0_i32_0 = arith.constant 0 : i32
    %c0_i32_1 = arith.constant 0 : i32
    return %c0_i32, %c0_i32_0 : i32, i32
  }
  func.func @transform_7(%arg0: i32) -> (i32, i32) {
    %c0_i32 = arith.constant 0 : i32
    %c0_i32_0 = arith.constant 0 : i32
    return %c0_i32, %arg0 : i32, i32
  }
}

</mosaic_0001>

<llo_original>
// kernel: critic_forward.1
$region0: #{critic_forward.1}
  #allocation0 [shape = 'u32[]', space=smem, size = 0x4, offset = 0x4, fixed_abs, tag = 'smem constant byte address 0x4 - core index']
  #allocation1 [shape = 'u32[144,128]{1,0:T(1,128)}', space=vmem, size = 0x12000, scoped, tag = 'internal scratch']
  #allocation2 [shape = 'f32[1,1]{1,0:T(1,128)S(6)}', space=smem, size = 0x200, scoped, tag = 'scoped memory for critic_forward.1']
  %s0 = inlined_call_operand.vmem [shape: f32[128,128], index: 0, kind: input, shape index: {}]
  %s1 = inlined_call_operand.vmem [shape: bf16[128,128], index: 1, kind: input, shape index: {}]
  %s2 = inlined_call_operand.vmem [shape: f32[1,128], index: 2, kind: input, shape index: {}]
  %s3 = inlined_call_operand.vmem [shape: bf16[128,128], index: 3, kind: input, shape index: {}]
  %s4 = inlined_call_operand.vmem [shape: f32[1,128], index: 4, kind: input, shape index: {}]
  %s5 = inlined_call_operand.vmem [shape: bf16[1,128], index: 5, kind: input, shape index: {}]
  %s6 = inlined_call_operand.<no memory space> [shape: f32[1,1], index: 6, kind: input, shape index: {}]
  %s7 = inlined_call_operand.vmem [shape: f32[1,128], index: 7, kind: output, shape index: {}]
  %s8 = sld [smem:[#allocation0]]
  $region38: #{critic_forward.1} parent=0
    _
  %s10 = ssub.s32 1, %s8
  %s11 = scalar_select 0, %s10, %s8
  %12 = sst [smem:[#allocation2]] %s6
  // Predicated region
  $region2: #{critic_forward.1} parent=0 // pred_check
    _
  $region3: #{critic_forward.1} parent=0 // pred_check_branch
    %14 = sbr.rel (0) target = $region5
  $region4: #{critic_forward.1} parent=0 // pred_region
    _
  $region5: #{critic_forward.1} parent=0 // pred_fallthru
    _
  // Predicated region
  $region6: #{critic_forward.1} parent=0 // pred_check
    _
  $region7: #{critic_forward.1} parent=0 // pred_check_branch
    %16 = sbr.rel (0) target = $region9
  $region8: #{critic_forward.1} parent=0 // pred_region
    _
  $region9: #{critic_forward.1} parent=0 // pred_fallthru
    _
  // Predicated region
  $region10: #{critic_forward.1} parent=0 // pred_check
    _
  $region11: #{critic_forward.1} parent=0 // pred_check_branch
    %18 = sbr.rel (0) target = $region13
  $region12: #{critic_forward.1} parent=0 // pred_region
    _
  $region13: #{critic_forward.1} parent=0 // pred_fallthru
    _
  // Predicated region
  $region14: #{critic_forward.1} parent=0 // pred_check
    _
  $region15: #{critic_forward.1} parent=0 // pred_check_branch
    %20 = sbr.rel (0) target = $region17
  $region16: #{critic_forward.1} parent=0 // pred_region
    _
  $region17: #{critic_forward.1} parent=0 // pred_fallthru
    _
  // Predicated region
  $region18: #{critic_forward.1} parent=0 // pred_check
    _
  $region19: #{critic_forward.1} parent=0 // pred_check_branch
    %22 = sbr.rel (0) target = $region21
  $region20: #{critic_forward.1} parent=0 // pred_region
    _
  $region21: #{critic_forward.1} parent=0 // pred_fallthru
    _
  // Predicated region
  $region22: #{critic_forward.1} parent=0 // pred_check
    _
  $region23: #{critic_forward.1} parent=0 // pred_check_branch
    %24 = sbr.rel (0) target = $region25
  $region24: #{critic_forward.1} parent=0 // pred_region
    _
  $region25: #{critic_forward.1} parent=0 // pred_fallthru
    _
  // Predicated region
  $region26: #{critic_forward.1} parent=0 // pred_check
    _
  $region27: #{critic_forward.1} parent=0 // pred_check_branch
    %26 = sbr.rel (0) target = $region29
  $region28: #{critic_forward.1} parent=0 // pred_region
    _
  $region29: #{critic_forward.1} parent=0 // pred_fallthru
    _
  %v28 = vld [vmem:[%s0] sm:$0xff]
  %v29 = vld [vmem:[%s0 + $0x8] sm:$0xff]
  %v30 = vld [vmem:[%s0 + $0x10] sm:$0xff]
  %v31 = vld [vmem:[%s0 + $0x18] sm:$0xff]
  %v32 = vld [vmem:[%s0 + $0x20] sm:$0xff]
  %v33 = vld [vmem:[%s0 + $0x28] sm:$0xff]
  %v34 = vld [vmem:[%s0 + $0x30] sm:$0xff]
  %v35 = vld [vmem:[%s0 + $0x38] sm:$0xff]
  %v36 = vld [vmem:[%s0 + $0x40] sm:$0xff]
  %v37 = vld [vmem:[%s0 + $0x48] sm:$0xff]
  %v38 = vld [vmem:[%s0 + $0x50] sm:$0xff]
  %v39 = vld [vmem:[%s0 + $0x58] sm:$0xff]
  %v40 = vld [vmem:[%s0 + $0x60] sm:$0xff]
  %v41 = vld [vmem:[%s0 + $0x68] sm:$0xff]
  %v42 = vld [vmem:[%s0 + $0x70] sm:$0xff]
  %v43 = vld [vmem:[%s0 + $0x78] sm:$0xff]
  %v44 = vpack.c.bf16 %v29, %v28
  %v45 = vpack.c.bf16 %v31, %v30
  %v46 = vpack.c.bf16 %v33, %v32
  %v47 = vpack.c.bf16 %v35, %v34
  %v48 = vpack.c.bf16 %v37, %v36
  %v49 = vpack.c.bf16 %v39, %v38
  %v50 = vpack.c.bf16 %v41, %v40
  %v51 = vpack.c.bf16 %v43, %v42
  %v52 = vld [vmem:[%s1] sm:$0xf]
  %v53 = vld [vmem:[%s1 + $0x4] sm:$0xf]
  %v54 = vld [vmem:[%s1 + $0x8] sm:$0xf]
  %v55 = vld [vmem:[%s1 + $0xc] sm:$0xf]
  %v56 = vld [vmem:[%s1 + $0x10] sm:$0xf]
  %v57 = vld [vmem:[%s1 + $0x14] sm:$0xf]
  %v58 = vld [vmem:[%s1 + $0x18] sm:$0xf]
  %v59 = vld [vmem:[%s1 + $0x1c] sm:$0xf]
  %v60 = vld [vmem:[%s1 + $0x20] sm:$0xf]
  %v61 = vld [vmem:[%s1 + $0x24] sm:$0xf]
  %v62 = vld [vmem:[%s1 + $0x28] sm:$0xf]
  %v63 = vld [vmem:[%s1 + $0x2c] sm:$0xf]
  %v64 = vld [vmem:[%s1 + $0x30] sm:$0xf]
  %v65 = vld [vmem:[%s1 + $0x34] sm:$0xf]
  %v66 = vld [vmem:[%s1 + $0x38] sm:$0xf]
  %v67 = vld [vmem:[%s1 + $0x3c] sm:$0xf]
  %v68 = vld [vmem:[%s2] sm:$0x1]
  %v70 = vlaneseq
  %v71 = vshrl.u32 %v70, 7
  %v72 = vsub.s32 0, %v71
  %v73 = vrot.slane %v68, %v72
  %v91 = vunpack.c.l.b16 %v52
  %v92 = vunpack.c.l.b16 %v53
  %v93 = vunpack.c.l.b16 %v54
  %v94 = vunpack.c.l.b16 %v55
  %v95 = vunpack.c.l.b16 %v56
  %v96 = vunpack.c.l.b16 %v57
  %v97 = vunpack.c.l.b16 %v58
  %v98 = vunpack.c.l.b16 %v59
  %v99 = vunpack.c.l.b16 %v60
  %v100 = vunpack.c.l.b16 %v61
  %v101 = vunpack.c.l.b16 %v62
  %v102 = vunpack.c.l.b16 %v63
  %v103 = vunpack.c.l.b16 %v64
  %v104 = vunpack.c.l.b16 %v65
  %v105 = vunpack.c.l.b16 %v66
  %v106 = vunpack.c.l.b16 %v67
  %v107 = vpack.c.b16 %v92, %v91
  %v108 = vpack.c.b16 %v94, %v93
  %v109 = vpack.c.b16 %v96, %v95
  %v110 = vpack.c.b16 %v98, %v97
  %v111 = vpack.c.b16 %v100, %v99
  %v112 = vpack.c.b16 %v102, %v101
  %v113 = vpack.c.b16 %v104, %v103
  %v114 = vpack.c.b16 %v106, %v105
  %123 = vmatprep.subr.bf16.mxu0 0
  %124 = vmatpush1.bf16.msra.mxu0 %v107
  %125 = vmatprep.subr.bf16.mxu0 0
  %126 = vmatpush1.bf16.msra.mxu0 %v108
  %127 = vmatprep.subr.bf16.mxu0 0
  %128 = vmatpush1.bf16.msra.mxu0 %v109
  %129 = vmatprep.subr.bf16.mxu0 0
  %130 = vmatpush1.bf16.msra.mxu0 %v110
  %131 = vmatprep.subr.bf16.mxu0 0
  %132 = vmatpush1.bf16.msra.mxu0 %v111
  %133 = vmatprep.subr.bf16.mxu0 0
  %134 = vmatpush1.bf16.msra.mxu0 %v112
  %135 = vmatprep.subr.bf16.mxu0 0
  %136 = vmatpush1.bf16.msra.mxu0 %v113
  %137 = vmatprep.subr.bf16.mxu0 0
  %138 = vmatpush1.bf16.msra.mxu0 %v114
  %139 = vmatprep.subr.bf16.mxu0 0
  %140 = vmatpush1.bf16.msra.mxu0 0
  %141 = vmatprep.subr.bf16.mxu0 0
  %142 = vmatpush1.bf16.msra.mxu0 0
  %143 = vmatprep.subr.bf16.mxu0 0
  %144 = vmatpush1.bf16.msra.mxu0 0
  %145 = vmatprep.subr.bf16.mxu0 0
  %146 = vmatpush1.bf16.msra.mxu0 0
  %147 = vmatprep.subr.bf16.mxu0 0
  %148 = vmatpush1.bf16.msra.mxu0 0
  %149 = vmatprep.subr.bf16.mxu0 0
  %150 = vmatpush1.bf16.msra.mxu0 0
  %151 = vmatprep.subr.bf16.mxu0 0
  %152 = vmatpush1.bf16.msra.mxu0 0
  %153 = vmatprep.subr.bf16.mxu0 0
  %154 = vmatpush1.bf16.msra.mxu0 0
  %155 = vmatprep.mubr.bf16.mxu0 0
  %156 = vmatmul.mubr.bf16.gmra.mrb[0].mxu0 %v44
  %v157 = vpop.f32.mrb[0].mxu0
  %v158 = vadd.f32 %v73, %v157
  %v159 = vpop.f32.mrb[0].mxu0
  %v160 = vpop.f32.mrb[0].mxu0
  %v161 = vadd.f32 %v73, %v160
  %v162 = vpop.f32.mrb[0].mxu0
  %163 = vmatprep.mubr.bf16.mxu0 0
  %164 = vmatmul.mubr.bf16.gmra.mrb[0].mxu0 %v45
  %v165 = vpop.f32.mrb[0].mxu0
  %v166 = vadd.f32 %v73, %v165
  %v167 = vpop.f32.mrb[0].mxu0
  %v168 = vpop.f32.mrb[0].mxu0
  %v169 = vadd.f32 %v73, %v168
  %v170 = vpop.f32.mrb[0].mxu0
  %171 = vmatprep.mubr.bf16.mxu0 0
  %172 = vmatmul.mubr.bf16.gmra.mrb[0].mxu0 %v46
  %v173 = vpop.f32.mrb[0].mxu0
  %v174 = vadd.f32 %v73, %v173
  %v175 = vpop.f32.mrb[0].mxu0
  %v176 = vpop.f32.mrb[0].mxu0
  %v177 = vadd.f32 %v73, %v176
  %v178 = vpop.f32.mrb[0].mxu0
  %179 = vmatprep.mubr.bf16.mxu0 0
  %180 = vmatmul.mubr.bf16.gmra.mrb[0].mxu0 %v47
  %v181 = vpop.f32.mrb[0].mxu0
  %v182 = vadd.f32 %v73, %v181
  %v183 = vpop.f32.mrb[0].mxu0
  %v184 = vpop.f32.mrb[0].mxu0
  %v185 = vadd.f32 %v73, %v184
  %v186 = vpop.f32.mrb[0].mxu0
  %187 = vmatprep.mubr.bf16.mxu0 0
  %188 = vmatmul.mubr.bf16.gmra.mrb[0].mxu0 %v48
  %v189 = vpop.f32.mrb[0].mxu0
  %v190 = vadd.f32 %v73, %v189
  %v191 = vpop.f32.mrb[0].mxu0
  %v192 = vpop.f32.mrb[0].mxu0
  %v193 = vadd.f32 %v73, %v192
  %v194 = vpop.f32.mrb[0].mxu0
  %195 = vmatprep.mubr.bf16.mxu0 0
  %196 = vmatmul.mubr.bf16.gmra.mrb[0].mxu0 %v49
  %v197 = vpop.f32.mrb[0].mxu0
  %v198 = vadd.f32 %v73, %v197
  %v199 = vpop.f32.mrb[0].mxu0
  %v200 = vpop.f32.mrb[0].mxu0
  %v201 = vadd.f32 %v73, %v200
  %v202 = vpop.f32.mrb[0].mxu0
  %203 = vmatprep.mubr.bf16.mxu0 0
  %204 = vmatmul.mubr.bf16.gmra.mrb[0].mxu0 %v50
  %v205 = vpop.f32.mrb[0].mxu0
  %v206 = vadd.f32 %v73, %v205
  %v207 = vpop.f32.mrb[0].mxu0
  %v208 = vpop.f32.mrb[0].mxu0
  %v209 = vadd.f32 %v73, %v208
  %v210 = vpop.f32.mrb[0].mxu0
  %211 = vmatprep.mubr.bf16.mxu0 0
  %212 = vmatmul.mubr.bf16.gmra.mrb[0].mxu0 %v51
  %v213 = vpop.f32.mrb[0].mxu0
  %v214 = vadd.f32 %v73, %v213
  %v215 = vpop.f32.mrb[0].mxu0
  %v216 = vpop.f32.mrb[0].mxu0
  %v217 = vadd.f32 %v73, %v216
  %v218 = vpop.f32.mrb[0].mxu0
  %219 = vdwg.mxu0
  %v220 = vmax.f32 %v158, 0.0
  %v221 = vmax.f32 %v161, 0.0
  %v222 = vmax.f32 %v166, 0.0
  %v223 = vmax.f32 %v169, 0.0
  %v224 = vmax.f32 %v174, 0.0
  %v225 = vmax.f32 %v177, 0.0
  %v226 = vmax.f32 %v182, 0.0
  %v227 = vmax.f32 %v185, 0.0
  %v228 = vmax.f32 %v190, 0.0
  %v229 = vmax.f32 %v193, 0.0
  %v230 = vmax.f32 %v198, 0.0
  %v231 = vmax.f32 %v201, 0.0
  %v232 = vmax.f32 %v206, 0.0
  %v233 = vmax.f32 %v209, 0.0
  %v234 = vmax.f32 %v214, 0.0
  %v235 = vmax.f32 %v217, 0.0
  %v236 = vpack.c.bf16 %v221, %v220
  %v237 = vpack.c.bf16 %v223, %v222
  %v238 = vpack.c.bf16 %v225, %v224
  %v239 = vpack.c.bf16 %v227, %v226
  %v240 = vpack.c.bf16 %v229, %v228
  %v241 = vpack.c.bf16 %v231, %v230
  %v242 = vpack.c.bf16 %v233, %v232
  %v243 = vpack.c.bf16 %v235, %v234
  %v244 = vld [vmem:[%s3] sm:$0xf]
  %v245 = vld [vmem:[%s3 + $0x4] sm:$0xf]
  %v246 = vld [vmem:[%s3 + $0x8] sm:$0xf]
  %v247 = vld [vmem:[%s3 + $0xc] sm:$0xf]
  %v248 = vld [vmem:[%s3 + $0x10] sm:$0xf]
  %v249 = vld [vmem:[%s3 + $0x14] sm:$0xf]
  %v250 = vld [vmem:[%s3 + $0x18] sm:$0xf]
  %v251 = vld [vmem:[%s3 + $0x1c] sm:$0xf]
  %v252 = vld [vmem:[%s3 + $0x20] sm:$0xf]
  %v253 = vld [vmem:[%s3 + $0x24] sm:$0xf]
  %v254 = vld [vmem:[%s3 + $0x28] sm:$0xf]
  %v255 = vld [vmem:[%s3 + $0x2c] sm:$0xf]
  %v256 = vld [vmem:[%s3 + $0x30] sm:$0xf]
  %v257 = vld [vmem:[%s3 + $0x34] sm:$0xf]
  %v258 = vld [vmem:[%s3 + $0x38] sm:$0xf]
  %v259 = vld [vmem:[%s3 + $0x3c] sm:$0xf]
  %v260 = vld [vmem:[%s4] sm:$0x1]
  %v262 = vlaneseq
  %v263 = vshrl.u32 %v262, 7
  %v264 = vsub.s32 0, %v263
  %v265 = vrot.slane %v260, %v264
  %v283 = vunpack.c.l.b16 %v244
  %v284 = vunpack.c.l.b16 %v245
  %v285 = vunpack.c.l.b16 %v246
  %v286 = vunpack.c.l.b16 %v247
  %v287 = vunpack.c.l.b16 %v248
  %v288 = vunpack.c.l.b16 %v249
  %v289 = vunpack.c.l.b16 %v250
  %v290 = vunpack.c.l.b16 %v251
  %v291 = vunpack.c.l.b16 %v252
  %v292 = vunpack.c.l.b16 %v253
  %v293 = vunpack.c.l.b16 %v254
  %v294 = vunpack.c.l.b16 %v255
  %v295 = vunpack.c.l.b16 %v256
  %v296 = vunpack.c.l.b16 %v257
  %v297 = vunpack.c.l.b16 %v258
  %v298 = vunpack.c.l.b16 %v259
  %v299 = vpack.c.b16 %v284, %v283
  %v300 = vpack.c.b16 %v286, %v285
  %v301 = vpack.c.b16 %v288, %v287
  %v302 = vpack.c.b16 %v290, %v289
  %v303 = vpack.c.b16 %v292, %v291
  %v304 = vpack.c.b16 %v294, %v293
  %v305 = vpack.c.b16 %v296, %v295
  %v306 = vpack.c.b16 %v298, %v297
  %315 = vmatprep.subr.bf16.mxu0 0
  %316 = vmatpush1.bf16.msra.mxu0 %v299
  %317 = vmatprep.subr.bf16.mxu0 0
  %318 = vmatpush1.bf16.msra.mxu0 %v300
  %319 = vmatprep.subr.bf16.mxu0 0
  %320 = vmatpush1.bf16.msra.mxu0 %v301
  %321 = vmatprep.subr.bf16.mxu0 0
  %322 = vmatpush1.bf16.msra.mxu0 %v302
  %323 = vmatprep.subr.bf16.mxu0 0
  %324 = vmatpush1.bf16.msra.mxu0 %v303
  %325 = vmatprep.subr.bf16.mxu0 0
  %326 = vmatpush1.bf16.msra.mxu0 %v304
  %327 = vmatprep.subr.bf16.mxu0 0
  %328 = vmatpush1.bf16.msra.mxu0 %v305
  %329 = vmatprep.subr.bf16.mxu0 0
  %330 = vmatpush1.bf16.msra.mxu0 %v306
  %331 = vmatprep.subr.bf16.mxu0 0
  %332 = vmatpush1.bf16.msra.mxu0 0
  %333 = vmatprep.subr.bf16.mxu0 0
  %334 = vmatpush1.bf16.msra.mxu0 0
  %335 = vmatprep.subr.bf16.mxu0 0
  %336 = vmatpush1.bf16.msra.mxu0 0
  %337 = vmatprep.subr.bf16.mxu0 0
  %338 = vmatpush1.bf16.msra.mxu0 0
  %339 = vmatprep.subr.bf16.mxu0 0
  %340 = vmatpush1.bf16.msra.mxu0 0
  %341 = vmatprep.subr.bf16.mxu0 0
  %342 = vmatpush1.bf16.msra.mxu0 0
  %343 = vmatprep.subr.bf16.mxu0 0
  %344 = vmatpush1.bf16.msra.mxu0 0
  %345 = vmatprep.subr.bf16.mxu0 0
  %346 = vmatpush1.bf16.msra.mxu0 0
  %347 = vmatprep.mubr.bf16.mxu0 0
  %348 = vmatmul.mubr.bf16.gmra.mrb[0].mxu0 %v236
  %v349 = vpop.f32.mrb[0].mxu0
  %v350 = vadd.f32 %v265, %v349
  %v351 = vpop.f32.mrb[0].mxu0
  %v352 = vpop.f32.mrb[0].mxu0
  %v353 = vadd.f32 %v265, %v352
  %v354 = vpop.f32.mrb[0].mxu0
  %355 = vmatprep.mubr.bf16.mxu0 0
  %356 = vmatmul.mubr.bf16.gmra.mrb[0].mxu0 %v237
  %v357 = vpop.f32.mrb[0].mxu0
  %v358 = vadd.f32 %v265, %v357
  %v359 = vpop.f32.mrb[0].mxu0
  %v360 = vpop.f32.mrb[0].mxu0
  %v361 = vadd.f32 %v265, %v360
  %v362 = vpop.f32.mrb[0].mxu0
  %363 = vmatprep.mubr.bf16.mxu0 0
  %364 = vmatmul.mubr.bf16.gmra.mrb[0].mxu0 %v238
  %v365 = vpop.f32.mrb[0].mxu0
  %v366 = vadd.f32 %v265, %v365
  %v367 = vpop.f32.mrb[0].mxu0
  %v368 = vpop.f32.mrb[0].mxu0
  %v369 = vadd.f32 %v265, %v368
  %v370 = vpop.f32.mrb[0].mxu0
  %371 = vmatprep.mubr.bf16.mxu0 0
  %372 = vmatmul.mubr.bf16.gmra.mrb[0].mxu0 %v239
  %v373 = vpop.f32.mrb[0].mxu0
  %v374 = vadd.f32 %v265, %v373
  %v375 = vpop.f32.mrb[0].mxu0
  %v376 = vpop.f32.mrb[0].mxu0
  %v377 = vadd.f32 %v265, %v376
  %v378 = vpop.f32.mrb[0].mxu0
  %379 = vmatprep.mubr.bf16.mxu0 0
  %380 = vmatmul.mubr.bf16.gmra.mrb[0].mxu0 %v240
  %v381 = vpop.f32.mrb[0].mxu0
  %v382 = vadd.f32 %v265, %v381
  %v383 = vpop.f32.mrb[0].mxu0
  %v384 = vpop.f32.mrb[0].mxu0
  %v385 = vadd.f32 %v265, %v384
  %v386 = vpop.f32.mrb[0].mxu0
  %387 = vmatprep.mubr.bf16.mxu0 0
  %388 = vmatmul.mubr.bf16.gmra.mrb[0].mxu0 %v241
  %v389 = vpop.f32.mrb[0].mxu0
  %v390 = vadd.f32 %v265, %v389
  %v391 = vpop.f32.mrb[0].mxu0
  %v392 = vpop.f32.mrb[0].mxu0
  %v393 = vadd.f32 %v265, %v392
  %v394 = vpop.f32.mrb[0].mxu0
  %395 = vmatprep.mubr.bf16.mxu0 0
  %396 = vmatmul.mubr.bf16.gmra.mrb[0].mxu0 %v242
  %v397 = vpop.f32.mrb[0].mxu0
  %v398 = vadd.f32 %v265, %v397
  %v399 = vpop.f32.mrb[0].mxu0
  %v400 = vpop.f32.mrb[0].mxu0
  %v401 = vadd.f32 %v265, %v400
  %v402 = vpop.f32.mrb[0].mxu0
  %403 = vmatprep.mubr.bf16.mxu0 0
  %404 = vmatmul.mubr.bf16.gmra.mrb[0].mxu0 %v243
  %v405 = vpop.f32.mrb[0].mxu0
  %v406 = vadd.f32 %v265, %v405
  %v407 = vpop.f32.mrb[0].mxu0
  %v408 = vpop.f32.mrb[0].mxu0
  %v409 = vadd.f32 %v265, %v408
  %v410 = vpop.f32.mrb[0].mxu0
  %411 = vdwg.mxu0
  %v412 = vmax.f32 %v350, 0.0
  %v413 = vmax.f32 %v353, 0.0
  %v414 = vmax.f32 %v358, 0.0
  %v415 = vmax.f32 %v361, 0.0
  %v416 = vmax.f32 %v366, 0.0
  %v417 = vmax.f32 %v369, 0.0
  %v418 = vmax.f32 %v374, 0.0
  %v419 = vmax.f32 %v377, 0.0
  %v420 = vmax.f32 %v382, 0.0
  %v421 = vmax.f32 %v385, 0.0
  %v422 = vmax.f32 %v390, 0.0
  %v423 = vmax.f32 %v393, 0.0
  %v424 = vmax.f32 %v398, 0.0
  %v425 = vmax.f32 %v401, 0.0
  %v426 = vmax.f32 %v406, 0.0
  %v427 = vmax.f32 %v409, 0.0
  %v428 = vld [vmem:[%s5] sm:$0x1]
  %v429 = vpack.c.bf16 %v413, %v412
  %v430 = vpack.c.bf16 %v415, %v414
  %v431 = vpack.c.bf16 %v417, %v416
  %v432 = vpack.c.bf16 %v419, %v418
  %v433 = vpack.c.bf16 %v421, %v420
  %v434 = vpack.c.bf16 %v423, %v422
  %v435 = vpack.c.bf16 %v425, %v424
  %v436 = vpack.c.bf16 %v427, %v426
  %s437 = sld [smem:[#allocation2]]
  %v438 = vstv %s437
  %439 = vmatprep.subr.bf16.mxu0 0
  %440 = vmatpush1.bf16.xpose.msra.mxu0 %v429
  %441 = vmatprep.subr.bf16.mxu0 0
  %442 = vmatpush1.bf16.xpose.msra.mxu0 %v430
  %443 = vmatprep.subr.bf16.mxu0 0
  %444 = vmatpush1.bf16.xpose.msra.mxu0 %v431
  %445 = vmatprep.subr.bf16.mxu0 0
  %446 = vmatpush1.bf16.xpose.msra.mxu0 %v432
  %447 = vmatprep.subr.bf16.mxu0 0
  %448 = vmatpush1.bf16.xpose.msra.mxu0 %v433
  %449 = vmatprep.subr.bf16.mxu0 0
  %450 = vmatpush1.bf16.xpose.msra.mxu0 %v434
  %451 = vmatprep.subr.bf16.mxu0 0
  %452 = vmatpush1.bf16.xpose.msra.mxu0 %v435
  %453 = vmatprep.subr.bf16.mxu0 0
  %454 = vmatpush1.bf16.xpose.msra.mxu0 %v436
  %455 = vmatprep.subr.bf16.mxu0 0
  %456 = vmatpush1.bf16.xpose.msra.mxu0 0
  %457 = vmatprep.subr.bf16.mxu0 0
  %458 = vmatpush1.bf16.xpose.msra.mxu0 0
  %459 = vmatprep.subr.bf16.mxu0 0
  %460 = vmatpush1.bf16.xpose.msra.mxu0 0
  %461 = vmatprep.subr.bf16.mxu0 0
  %462 = vmatpush1.bf16.xpose.msra.mxu0 0
  %463 = vmatprep.subr.bf16.mxu0 0
  %464 = vmatpush1.bf16.xpose.msra.mxu0 0
  %465 = vmatprep.subr.bf16.mxu0 0
  %466 = vmatpush1.bf16.xpose.msra.mxu0 0
  %467 = vmatprep.subr.bf16.mxu0 0
  %468 = vmatpush1.bf16.xpose.msra.mxu0 0
  %469 = vmatprep.subr.bf16.mxu0 0
  %470 = vmatpush1.bf16.xpose.msra.mxu0 0
  %471 = vmatprep.mubr.bf16.mxu0 0
  %472 = vmatmul.mubr.bf16.gmra.mrb[0].mxu0 %v428
  %v473 = vpop.f32.mrb[0].mxu0
  %v474 = vadd.f32 %v438, %v473
  %v475 = vpop.f32.mrb[0].mxu0
  %v476 = vpop.f32.mrb[0].mxu0
  %v477 = vpop.f32.mrb[0].mxu0
  %478 = vdwg.mxu0
  %479 = vst [vmem:[%s7] sm:$0x1] %v474
  // Predicated region
  $region30: #{critic_forward.1} parent=0 // pred_check
    _
  $region31: #{critic_forward.1} parent=0 // pred_check_branch
    %481 = sbr.rel (0) target = $region33
  $region32: #{critic_forward.1} parent=0 // pred_region
    _
  $region33: #{critic_forward.1} parent=0 // pred_fallthru
    _
  // Predicated region
  $region34: #{critic_forward.1} parent=0 // pred_check
    _
  $region35: #{critic_forward.1} parent=0 // pred_check_branch
    %483 = sbr.rel (0) target = $region37
  $region36: #{critic_forward.1} parent=0 // pred_region
    _
  $region37: #{critic_forward.1} parent=0 // pred_fallthru
    _

</llo_original>
